<compile_context>
chip_gen: v5e
topology: v5e:2x2
jax: 0.10.0
libtpu: 0.0.40
codegen_flags: <defaults>
</compile_context>

<pallas_src>
import jax
import jax.numpy as jnp
from jax.experimental import pallas as pl
from jax.experimental.pallas import tpu as pltpu


def dynamics_kernel(t_ref, at_ref, init_ref, out_ref, e_ref):
    """t_ref: SMEM (T,) f32; at_ref: VMEM (S, S) holding A^T;
    init_ref: VMEM (B, S); out_ref: VMEM (B, T*S); e_ref: VMEM scratch (S, T*S)."""
    S = at_ref.shape[0]
    T = t_ref.shape[0]
    at = at_ref[...]                       # A^T, kept resident in vregs
    # Static unroll over the (small) number of time points: fill one
    # S-wide column block of E per time step.  All stores are VMEM-local.
    for i in range(T):
        e_ref[:, i * S:(i + 1) * S] = jnp.exp(at * t_ref[i])
    # Single fused matmul: (B, S) x (S, T*S) -> (B, T*S), lane-dense output.
    out_ref[...] = jnp.dot(init_ref[...], e_ref[...],
                           preferred_element_type=jnp.float32)


def dynamics_forward(t, A, initial):
    """t: (T,) f32, A: (S, S) f32, initial: (B, S) f32 -> (B, T, S) f32.

    Matches the PyTorch module for B, T, S > 1 (torch's .squeeze() would
    additionally drop any size-1 dims).
    """
    (T,) = t.shape
    B, S = initial.shape
    a_t = A.T                               # one-time (S, S) transpose in XLA
    out_flat = pl.pallas_call(
        dynamics_kernel,
        out_shape=jax.ShapeDtypeStruct((B, T * S), jnp.float32),
        in_specs=[
            pl.BlockSpec(memory_space=pltpu.MemorySpace.SMEM),   # t (scalars)
            pl.BlockSpec(memory_space=pltpu.MemorySpace.VMEM),   # A^T
            pl.BlockSpec(memory_space=pltpu.MemorySpace.VMEM),   # initial
        ],
        out_specs=pl.BlockSpec(memory_space=pltpu.MemorySpace.VMEM),
        scratch_shapes=[pltpu.VMEM((S, T * S), jnp.float32)],
    )(t, a_t, initial)
    return out_flat.reshape(B, T, S)        # contiguous last-dim split (free)


def dynamics_reference(t, A, initial):
    x = jnp.exp(A[None] * t[:, None, None])              # (T, S, S)
    return jnp.einsum("tjk,bk->btj", x, initial)          # (B, T, S)


if __name__ == "__main__":
    SIZE = 32   # hidden size (S)
    B = 2       # batch of initial conditions
    T = 8       # number of time points

    key = jax.random.PRNGKey(0)
    k_a, k_t, k_init = jax.random.split(key, 3)

    # nn.Parameter(torch.rand(size, size)) -> uniform [0, 1)
    A = jax.random.uniform(k_a, (SIZE, SIZE), dtype=jnp.float32)
    t = jax.random.uniform(k_t, (T,), dtype=jnp.float32)
    initial = jax.random.normal(k_init, (B, SIZE), dtype=jnp.float32)

    fwd = jax.jit(dynamics_forward)
    out = jax.block_until_ready(fwd(t, A, initial))

    ref = dynamics_reference(t, A, initial)
    assert out.shape == (B, T, SIZE), out.shape
    assert jnp.allclose(out, ref, rtol=1e-5, atol=1e-5), "mismatch vs reference"

    print("KERNEL_OK")
</pallas_src>

<mosaic_0001>
module attributes {stable_mosaic.version = 11 : i64} {
  func.func @dynamics_kernel(%arg0: memref<8xf32, #tpu.memory_space<smem>>, %arg1: memref<32x32xf32, #tpu.memory_space<vmem>>, %arg2: memref<2x32xf32, #tpu.memory_space<vmem>>, %arg3: memref<2x256xf32, #tpu.memory_space<vmem>>, %arg4: memref<32x256xf32, #tpu.memory_space<vmem>>) attributes {dimension_semantics = [], scalar_prefetch = 0 : i64, scratch_operands = 1 : i64, tpu.core_type = #tpu.core_type<tc>} {
    %c0 = arith.constant 0 : index
    %c0_0 = arith.constant 0 : index
    %0 = vector.load %arg1[%c0, %c0_0] : memref<32x32xf32, #tpu.memory_space<vmem>>, vector<32x32xf32>
    %c0_1 = arith.constant 0 : index
    %1 = memref.load %arg0[%c0_1] : memref<8xf32, #tpu.memory_space<smem>>
    %2 = vector.broadcast %1 : f32 to vector<32x32xf32>
    %3 = arith.mulf %0, %2 : vector<32x32xf32>
    %4 = math.exp %3 : vector<32x32xf32>
    %c0_2 = arith.constant 0 : index
    %c0_3 = arith.constant 0 : index
    %5 = vector.load %arg4[%c0_2, %c0_3] : memref<32x256xf32, #tpu.memory_space<vmem>>, vector<32x32xf32>
    tpu.vector_store %arg4[%c0_2, %c0_3], %4 {strides = array<i32>} : memref<32x256xf32, #tpu.memory_space<vmem>>, vector<32x32xf32>,
    %c1 = arith.constant 1 : index
    %6 = memref.load %arg0[%c1] : memref<8xf32, #tpu.memory_space<smem>>
    %7 = vector.broadcast %6 : f32 to vector<32x32xf32>
    %8 = arith.mulf %0, %7 : vector<32x32xf32>
    %9 = math.exp %8 : vector<32x32xf32>
    %c0_4 = arith.constant 0 : index
    %c32 = arith.constant 32 : index
    %10 = vector.load %arg4[%c0_4, %c32] : memref<32x256xf32, #tpu.memory_space<vmem>>, vector<32x32xf32>
    tpu.vector_store %arg4[%c0_4, %c32], %9 {strides = array<i32>} : memref<32x256xf32, #tpu.memory_space<vmem>>, vector<32x32xf32>,
    %c2 = arith.constant 2 : index
    %11 = memref.load %arg0[%c2] : memref<8xf32, #tpu.memory_space<smem>>
    %12 = vector.broadcast %11 : f32 to vector<32x32xf32>
    %13 = arith.mulf %0, %12 : vector<32x32xf32>
    %14 = math.exp %13 : vector<32x32xf32>
    %c0_5 = arith.constant 0 : index
    %c64 = arith.constant 64 : index
    %15 = vector.load %arg4[%c0_5, %c64] : memref<32x256xf32, #tpu.memory_space<vmem>>, vector<32x32xf32>
    tpu.vector_store %arg4[%c0_5, %c64], %14 {strides = array<i32>} : memref<32x256xf32, #tpu.memory_space<vmem>>, vector<32x32xf32>,
    %c3 = arith.constant 3 : index
    %16 = memref.load %arg0[%c3] : memref<8xf32, #tpu.memory_space<smem>>
    %17 = vector.broadcast %16 : f32 to vector<32x32xf32>
    %18 = arith.mulf %0, %17 : vector<32x32xf32>
    %19 = math.exp %18 : vector<32x32xf32>
    %c0_6 = arith.constant 0 : index
    %c96 = arith.constant 96 : index
    %20 = vector.load %arg4[%c0_6, %c96] : memref<32x256xf32, #tpu.memory_space<vmem>>, vector<32x32xf32>
    tpu.vector_store %arg4[%c0_6, %c96], %19 {strides = array<i32>} : memref<32x256xf32, #tpu.memory_space<vmem>>, vector<32x32xf32>,
    %c4 = arith.constant 4 : index
    %21 = memref.load %arg0[%c4] : memref<8xf32, #tpu.memory_space<smem>>
    %22 = vector.broadcast %21 : f32 to vector<32x32xf32>
    %23 = arith.mulf %0, %22 : vector<32x32xf32>
    %24 = math.exp %23 : vector<32x32xf32>
    %c0_7 = arith.constant 0 : index
    %c128 = arith.constant 128 : index
    %25 = vector.load %arg4[%c0_7, %c128] : memref<32x256xf32, #tpu.memory_space<vmem>>, vector<32x32xf32>
    tpu.vector_store %arg4[%c0_7, %c128], %24 {strides = array<i32>} : memref<32x256xf32, #tpu.memory_space<vmem>>, vector<32x32xf32>,
    %c5 = arith.constant 5 : index
    %26 = memref.load %arg0[%c5] : memref<8xf32, #tpu.memory_space<smem>>
    %27 = vector.broadcast %26 : f32 to vector<32x32xf32>
    %28 = arith.mulf %0, %27 : vector<32x32xf32>
    %29 = math.exp %28 : vector<32x32xf32>
    %c0_8 = arith.constant 0 : index
    %c160 = arith.constant 160 : index
    %30 = vector.load %arg4[%c0_8, %c160] : memref<32x256xf32, #tpu.memory_space<vmem>>, vector<32x32xf32>
    tpu.vector_store %arg4[%c0_8, %c160], %29 {strides = array<i32>} : memref<32x256xf32, #tpu.memory_space<vmem>>, vector<32x32xf32>,
    %c6 = arith.constant 6 : index
    %31 = memref.load %arg0[%c6] : memref<8xf32, #tpu.memory_space<smem>>
    %32 = vector.broadcast %31 : f32 to vector<32x32xf32>
    %33 = arith.mulf %0, %32 : vector<32x32xf32>
    %34 = math.exp %33 : vector<32x32xf32>
    %c0_9 = arith.constant 0 : index
    %c192 = arith.constant 192 : index
    %35 = vector.load %arg4[%c0_9, %c192] : memref<32x256xf32, #tpu.memory_space<vmem>>, vector<32x32xf32>
    tpu.vector_store %arg4[%c0_9, %c192], %34 {strides = array<i32>} : memref<32x256xf32, #tpu.memory_space<vmem>>, vector<32x32xf32>,
    %c7 = arith.constant 7 : index
    %36 = memref.load %arg0[%c7] : memref<8xf32, #tpu.memory_space<smem>>
    %37 = vector.broadcast %36 : f32 to vector<32x32xf32>
    %38 = arith.mulf %0, %37 : vector<32x32xf32>
    %39 = math.exp %38 : vector<32x32xf32>
    %c0_10 = arith.constant 0 : index
    %c224 = arith.constant 224 : index
    %40 = vector.load %arg4[%c0_10, %c224] : memref<32x256xf32, #tpu.memory_space<vmem>>, vector<32x32xf32>
    tpu.vector_store %arg4[%c0_10, %c224], %39 {strides = array<i32>} : memref<32x256xf32, #tpu.memory_space<vmem>>, vector<32x32xf32>,
    %c0_11 = arith.constant 0 : index
    %c0_12 = arith.constant 0 : index
    %41 = vector.load %arg2[%c0_11, %c0_12] : memref<2x32xf32, #tpu.memory_space<vmem>>, vector<2x32xf32>
    %c0_13 = arith.constant 0 : index
    %c0_14 = arith.constant 0 : index
    %42 = vector.load %arg4[%c0_13, %c0_14] : memref<32x256xf32, #tpu.memory_space<vmem>>, vector<32x256xf32>
    %cst = arith.constant dense<0.000000e+00> : vector<2x256xf32>
    %43 = tpu.matmul %41, %42, %cst {dimension_numbers = #tpu.dot_dimension_numbers<[1], [0], [0], [1], [0, 0, 1, 1], [], []>} : vector<2x32xf32>, vector<32x256xf32>, vector<2x256xf32> -> vector<2x256xf32>
    %c0_15 = arith.constant 0 : index
    %c0_16 = arith.constant 0 : index
    %44 = vector.load %arg3[%c0_15, %c0_16] : memref<2x256xf32, #tpu.memory_space<vmem>>, vector<2x256xf32>
    tpu.vector_store %arg3[%c0_15, %c0_16], %43 {strides = array<i32>} : memref<2x256xf32, #tpu.memory_space<vmem>>, vector<2x256xf32>,
    return
  }
}

</mosaic_0001>

<llo_original>
// kernel: dynamics_forward.1
$region0: #{dynamics_forward.1}
  #allocation0 [shape = 'u32[]', space=smem, size = 0x4, offset = 0x4, fixed_abs, tag = 'smem constant byte address 0x4 - core index']
  #allocation1 [shape = 'u32[72,128]{1,0:T(1,128)}', space=vmem, size = 0x9000, scoped, tag = 'internal scratch']
  #allocation2 [shape = 'f32[32,256]{1,0:T(8,128)}', space=vmem, size = 0x8000, scoped, tag = 'scratch operand']
  %s0 = inlined_call_operand.vmem [shape: f32[8], index: 0, kind: input, shape index: {}]
  %s1 = inlined_call_operand.vmem [shape: f32[32,32], index: 1, kind: input, shape index: {}]
  %s2 = inlined_call_operand.vmem [shape: f32[2,32], index: 2, kind: input, shape index: {}]
  %s3 = inlined_call_operand.vmem [shape: f32[2,256], index: 3, kind: output, shape index: {}]
  %s4 = sld [smem:[#allocation0]]
  $region26: #{dynamics_forward.1} parent=0
    _
  %s6 = ssub.s32 1, %s4
  %s7 = scalar_select 0, %s6, %s4
  $region1: #{dynamics_forward.1} parent=0
    #allocation3 [shape = 'u8[512]{0}', space=smem, size = 0x200, scoped, tag = 'input window, operand 0, single buffered']
    #allocation4 [shape = 's32[1]{0}', space=sflag, size = 0x4, scoped, tag = 'scoped memory for dynamics_forward.1']
    %8 = vsyncpa [#allocation4], 0
    // Predicated region
    $region2: #{dynamics_forward.1} parent=1 // pred_check
      _
    $region3: #{dynamics_forward.1} parent=1 // pred_check_branch
      %10 = sbr.rel (0) target = $region5
    $region4: #{dynamics_forward.1} parent=1 // pred_region
      %12 = vsyncadd [#allocation4], 0
      %s14 = sshll.u32 %s0, 4
      %s15 = int_to_ptr.vmem [resolvable:$true] %s14
      %17 = dma.vmem_to_smem %s15, 16, [#allocation3], [#allocation4]
    $region5: #{dynamics_forward.1} parent=1 // pred_fallthru
      _
    // Predicated region
    $region6: #{dynamics_forward.1} parent=1 // pred_check
      _
    $region7: #{dynamics_forward.1} parent=1 // pred_check_branch
      %19 = sbr.rel (0) target = $region9
    $region8: #{dynamics_forward.1} parent=1 // pred_region
      _
    $region9: #{dynamics_forward.1} parent=1 // pred_fallthru
      _
    // Predicated region
    $region10: #{dynamics_forward.1} parent=1 // pred_check
      _
    $region11: #{dynamics_forward.1} parent=1 // pred_check_branch
      %21 = sbr.rel (0) target = $region13
    $region12: #{dynamics_forward.1} parent=1 // pred_region
      _
    $region13: #{dynamics_forward.1} parent=1 // pred_fallthru
      _
    // Predicated region
    $region14: #{dynamics_forward.1} parent=1 // pred_check
      _
    $region15: #{dynamics_forward.1} parent=1 // pred_check_branch
      %23 = sbr.rel (0) target = $region17
    $region16: #{dynamics_forward.1} parent=1 // pred_region
      %25 = dma.done [#allocation4], 16
    $region17: #{dynamics_forward.1} parent=1 // pred_fallthru
      _
    %26 = sfence
    %v27 = vld [vmem:[%s1] sm:$0xff]
    %v28 = vld [vmem:[%s1 + $0x8] sm:$0xff]
    %v29 = vld [vmem:[%s1 + $0x10] sm:$0xff]
    %v30 = vld [vmem:[%s1 + $0x18] sm:$0xff]
    %s31 = sld [smem:[#allocation3]]
    %v32 = vstv %s31
    %v33 = vmul.f32 %v27, %v32
    %v34 = vmul.f32 %v28, %v32
    %v35 = vmul.f32 %v29, %v32
    %v36 = vmul.f32 %v30, %v32
    %v37 = vmul.f32 %v33, 1.442695
    %v38 = vpow.pop %v37
    %v39 = vmul.f32 %v34, 1.442695
    %v40 = vpow.pop %v39
    %v41 = vmul.f32 %v35, 1.442695
    %v42 = vpow.pop %v41
    %v43 = vmul.f32 %v36, 1.442695
    %v44 = vpow.pop %v43
    %vm45 = vcmask 261120
    %46 = vst.msk [vmem:[#allocation2] sm:$0xff] %vm45, %v38
    %47 = vst.msk [vmem:[#allocation2 + $0x10] sm:$0xff] %vm45, %v40
    %48 = vst.msk [vmem:[#allocation2 + $0x20] sm:$0xff] %vm45, %v42
    %49 = vst.msk [vmem:[#allocation2 + $0x30] sm:$0xff] %vm45, %v44
    %s50 = sld [smem:[#allocation3 + $0x1]]
    %v51 = vstv %s50
    %v52 = vmul.f32 %v27, %v51
    %v53 = vmul.f32 %v28, %v51
    %v54 = vmul.f32 %v29, %v51
    %v55 = vmul.f32 %v30, %v51
    %v56 = vmul.f32 %v52, 1.442695
    %v57 = vpow.pop %v56
    %v58 = vmul.f32 %v53, 1.442695
    %v59 = vpow.pop %v58
    %v60 = vmul.f32 %v54, 1.442695
    %v61 = vpow.pop %v60
    %v62 = vmul.f32 %v55, 1.442695
    %v63 = vpow.pop %v62
    %68 = vrot.lane.b32.xlu0 %v57, 32
    %v69 = vpop.permute.xlu0 %68
    %70 = vrot.lane.b32.xlu0 %v59, 32
    %v71 = vpop.permute.xlu0 %70
    %72 = vrot.lane.b32.xlu0 %v61, 32
    %v73 = vpop.permute.xlu0 %72
    %74 = vrot.lane.b32.xlu0 %v63, 32
    %v75 = vpop.permute.xlu0 %74
    %vm80 = vcmask 523520
    %81 = vst.msk [vmem:[#allocation2] sm:$0xff] %vm80, %v69
    %82 = vst.msk [vmem:[#allocation2 + $0x10] sm:$0xff] %vm80, %v71
    %83 = vst.msk [vmem:[#allocation2 + $0x20] sm:$0xff] %vm80, %v73
    %84 = vst.msk [vmem:[#allocation2 + $0x30] sm:$0xff] %vm80, %v75
    %s85 = sld [smem:[#allocation3 + $0x2]]
    %v86 = vstv %s85
    %v87 = vmul.f32 %v27, %v86
    %v88 = vmul.f32 %v28, %v86
    %v89 = vmul.f32 %v29, %v86
    %v90 = vmul.f32 %v30, %v86
    %v91 = vmul.f32 %v87, 1.442695
    %v92 = vpow.pop %v91
    %v93 = vmul.f32 %v88, 1.442695
    %v94 = vpow.pop %v93
    %v95 = vmul.f32 %v89, 1.442695
    %v96 = vpow.pop %v95
    %v97 = vmul.f32 %v90, 1.442695
    %v98 = vpow.pop %v97
    %103 = vrot.lane.b32.xlu0 %v92, 64
    %v104 = vpop.permute.xlu0 %103
    %105 = vrot.lane.b32.xlu0 %v94, 64
    %v106 = vpop.permute.xlu0 %105
    %107 = vrot.lane.b32.xlu0 %v96, 64
    %v108 = vpop.permute.xlu0 %107
    %109 = vrot.lane.b32.xlu0 %v98, 64
    %v110 = vpop.permute.xlu0 %109
    %vm115 = vcmask 785920
    %116 = vst.msk [vmem:[#allocation2] sm:$0xff] %vm115, %v104
    %117 = vst.msk [vmem:[#allocation2 + $0x10] sm:$0xff] %vm115, %v106
    %118 = vst.msk [vmem:[#allocation2 + $0x20] sm:$0xff] %vm115, %v108
    %119 = vst.msk [vmem:[#allocation2 + $0x30] sm:$0xff] %vm115, %v110
    %s120 = sld [smem:[#allocation3 + $0x3]]
    %v121 = vstv %s120
    %v122 = vmul.f32 %v27, %v121
    %v123 = vmul.f32 %v28, %v121
    %v124 = vmul.f32 %v29, %v121
    %v125 = vmul.f32 %v30, %v121
    %v126 = vmul.f32 %v122, 1.442695
    %v127 = vpow.pop %v126
    %v128 = vmul.f32 %v123, 1.442695
    %v129 = vpow.pop %v128
    %v130 = vmul.f32 %v124, 1.442695
    %v131 = vpow.pop %v130
    %v132 = vmul.f32 %v125, 1.442695
    %v133 = vpow.pop %v132
    %138 = vrot.lane.b32.xlu0 %v127, 96
    %v139 = vpop.permute.xlu0 %138
    %140 = vrot.lane.b32.xlu0 %v129, 96
    %v141 = vpop.permute.xlu0 %140
    %142 = vrot.lane.b32.xlu0 %v131, 96
    %v143 = vpop.permute.xlu0 %142
    %144 = vrot.lane.b32.xlu0 %v133, 96
    %v145 = vpop.permute.xlu0 %144
    %vm150 = vcmask 1048320
    %151 = vst.msk [vmem:[#allocation2] sm:$0xff] %vm150, %v139
    %152 = vst.msk [vmem:[#allocation2 + $0x10] sm:$0xff] %vm150, %v141
    %153 = vst.msk [vmem:[#allocation2 + $0x20] sm:$0xff] %vm150, %v143
    %154 = vst.msk [vmem:[#allocation2 + $0x30] sm:$0xff] %vm150, %v145
    %s155 = sld [smem:[#allocation3 + $0x4]]
    %v156 = vstv %s155
    %v157 = vmul.f32 %v27, %v156
    %v158 = vmul.f32 %v28, %v156
    %v159 = vmul.f32 %v29, %v156
    %v160 = vmul.f32 %v30, %v156
    %v161 = vmul.f32 %v157, 1.442695
    %v162 = vpow.pop %v161
    %v163 = vmul.f32 %v158, 1.442695
    %v164 = vpow.pop %v163
    %v165 = vmul.f32 %v159, 1.442695
    %v166 = vpow.pop %v165
    %v167 = vmul.f32 %v160, 1.442695
    %v168 = vpow.pop %v167
    %169 = vst.msk [vmem:[#allocation2 + $0x8] sm:$0xff] %vm45, %v162
    %170 = vst.msk [vmem:[#allocation2 + $0x18] sm:$0xff] %vm45, %v164
    %171 = vst.msk [vmem:[#allocation2 + $0x28] sm:$0xff] %vm45, %v166
    %172 = vst.msk [vmem:[#allocation2 + $0x38] sm:$0xff] %vm45, %v168
    %s173 = sld [smem:[#allocation3 + $0x5]]
    %v174 = vstv %s173
    %v175 = vmul.f32 %v27, %v174
    %v176 = vmul.f32 %v28, %v174
    %v177 = vmul.f32 %v29, %v174
    %v178 = vmul.f32 %v30, %v174
    %v179 = vmul.f32 %v175, 1.442695
    %v180 = vpow.pop %v179
    %v181 = vmul.f32 %v176, 1.442695
    %v182 = vpow.pop %v181
    %v183 = vmul.f32 %v177, 1.442695
    %v184 = vpow.pop %v183
    %v185 = vmul.f32 %v178, 1.442695
    %v186 = vpow.pop %v185
    %191 = vrot.lane.b32.xlu0 %v180, 32
    %v192 = vpop.permute.xlu0 %191
    %193 = vrot.lane.b32.xlu0 %v182, 32
    %v194 = vpop.permute.xlu0 %193
    %195 = vrot.lane.b32.xlu0 %v184, 32
    %v196 = vpop.permute.xlu0 %195
    %197 = vrot.lane.b32.xlu0 %v186, 32
    %v198 = vpop.permute.xlu0 %197
    %203 = vst.msk [vmem:[#allocation2 + $0x8] sm:$0xff] %vm80, %v192
    %204 = vst.msk [vmem:[#allocation2 + $0x18] sm:$0xff] %vm80, %v194
    %205 = vst.msk [vmem:[#allocation2 + $0x28] sm:$0xff] %vm80, %v196
    %206 = vst.msk [vmem:[#allocation2 + $0x38] sm:$0xff] %vm80, %v198
    %s207 = sld [smem:[#allocation3 + $0x6]]
    %v208 = vstv %s207
    %v209 = vmul.f32 %v27, %v208
    %v210 = vmul.f32 %v28, %v208
    %v211 = vmul.f32 %v29, %v208
    %v212 = vmul.f32 %v30, %v208
    %v213 = vmul.f32 %v209, 1.442695
    %v214 = vpow.pop %v213
    %v215 = vmul.f32 %v210, 1.442695
    %v216 = vpow.pop %v215
    %v217 = vmul.f32 %v211, 1.442695
    %v218 = vpow.pop %v217
    %v219 = vmul.f32 %v212, 1.442695
    %v220 = vpow.pop %v219
    %225 = vrot.lane.b32.xlu0 %v214, 64
    %v226 = vpop.permute.xlu0 %225
    %227 = vrot.lane.b32.xlu0 %v216, 64
    %v228 = vpop.permute.xlu0 %227
    %229 = vrot.lane.b32.xlu0 %v218, 64
    %v230 = vpop.permute.xlu0 %229
    %231 = vrot.lane.b32.xlu0 %v220, 64
    %v232 = vpop.permute.xlu0 %231
    %237 = vst.msk [vmem:[#allocation2 + $0x8] sm:$0xff] %vm115, %v226
    %238 = vst.msk [vmem:[#allocation2 + $0x18] sm:$0xff] %vm115, %v228
    %239 = vst.msk [vmem:[#allocation2 + $0x28] sm:$0xff] %vm115, %v230
    %240 = vst.msk [vmem:[#allocation2 + $0x38] sm:$0xff] %vm115, %v232
    %s241 = sld [smem:[#allocation3 + $0x7]]
    %v242 = vstv %s241
    %v243 = vmul.f32 %v27, %v242
    %v244 = vmul.f32 %v28, %v242
    %v245 = vmul.f32 %v29, %v242
    %v246 = vmul.f32 %v30, %v242
    %v247 = vmul.f32 %v243, 1.442695
    %v248 = vpow.pop %v247
    %v249 = vmul.f32 %v244, 1.442695
    %v250 = vpow.pop %v249
    %v251 = vmul.f32 %v245, 1.442695
    %v252 = vpow.pop %v251
    %v253 = vmul.f32 %v246, 1.442695
    %v254 = vpow.pop %v253
    %259 = vrot.lane.b32.xlu0 %v248, 96
    %v260 = vpop.permute.xlu0 %259
    %261 = vrot.lane.b32.xlu0 %v250, 96
    %v262 = vpop.permute.xlu0 %261
    %263 = vrot.lane.b32.xlu0 %v252, 96
    %v264 = vpop.permute.xlu0 %263
    %265 = vrot.lane.b32.xlu0 %v254, 96
    %v266 = vpop.permute.xlu0 %265
    %271 = vst.msk [vmem:[#allocation2 + $0x8] sm:$0xff] %vm150, %v260
    %272 = vst.msk [vmem:[#allocation2 + $0x18] sm:$0xff] %vm150, %v262
    %273 = vst.msk [vmem:[#allocation2 + $0x28] sm:$0xff] %vm150, %v264
    %274 = vst.msk [vmem:[#allocation2 + $0x38] sm:$0xff] %vm150, %v266
    %v275 = vld [vmem:[%s2] sm:$0x3]
    %v276 = vld [vmem:[#allocation2] sm:$0xff]
    %v277 = vld [vmem:[#allocation2 + $0x8] sm:$0xff]
    %v278 = vld [vmem:[#allocation2 + $0x10] sm:$0xff]
    %v279 = vld [vmem:[#allocation2 + $0x18] sm:$0xff]
    %v280 = vld [vmem:[#allocation2 + $0x20] sm:$0xff]
    %v281 = vld [vmem:[#allocation2 + $0x28] sm:$0xff]
    %v282 = vld [vmem:[#allocation2 + $0x30] sm:$0xff]
    %v283 = vld [vmem:[#allocation2 + $0x38] sm:$0xff]
    %v285 = vsel %vm45, %v275, 0
    %287 = vmatpush.msra.mxu0 0.0
    %288 = vmatpush.msra.mxu0 0.0
    %289 = vmatpush.msra.mxu0 0.0
    %290 = vmatpush.msra.mxu0 0.0
    %291 = vmatpush.msra.mxu0 0.0
    %292 = vmatpush.msra.mxu0 0.0
    %293 = vmatpush.msra.mxu0 0.0
    %294 = vmatpush.msra.mxu0 0.0
    %295 = vmatpush.msra.mxu0 0.0
    %296 = vmatpush.msra.mxu0 0.0
    %297 = vmatpush.msra.mxu0 0.0
    %298 = vmatpush.msra.mxu0 0.0
    %299 = vmatpush.msra.mxu0 %v282
    %300 = vmatpush.msra.mxu0 %v280
    %301 = vmatpush.msra.mxu0 %v278
    %302 = vmatpush.msra.mxu0 %v276
    %303 = vmatmul.f32.gmra.mxu0 %v285
    %v304 = vpop.f32.mrf.mxu0
    %v305 = vadd.f32 0.0, %v304
    %306 = vdwg.mxu0
    %307 = vmatpush.msra.mxu0 0.0
    %308 = vmatpush.msra.mxu0 0.0
    %309 = vmatpush.msra.mxu0 0.0
    %310 = vmatpush.msra.mxu0 0.0
    %311 = vmatpush.msra.mxu0 0.0
    %312 = vmatpush.msra.mxu0 0.0
    %313 = vmatpush.msra.mxu0 0.0
    %314 = vmatpush.msra.mxu0 0.0
    %315 = vmatpush.msra.mxu0 0.0
    %316 = vmatpush.msra.mxu0 0.0
    %317 = vmatpush.msra.mxu0 0.0
    %318 = vmatpush.msra.mxu0 0.0
    %319 = vmatpush.msra.mxu0 %v283
    %320 = vmatpush.msra.mxu0 %v281
    %321 = vmatpush.msra.mxu0 %v279
    %322 = vmatpush.msra.mxu0 %v277
    %323 = vmatmul.f32.gmra.mxu0 %v285
    %v324 = vpop.f32.mrf.mxu0
    %v325 = vadd.f32 0.0, %v324
    %326 = vdwg.mxu0
    %v329 = vrot.slane %v325, 6
    %vm330 = vcmask 1041408
    %v331 = vsel %vm330, %v305, %v329
    %333 = vst [vmem:[%s3] sm:$0xf] %v331
    // Predicated region
    $region18: #{dynamics_forward.1} parent=1 // pred_check
      _
    $region19: #{dynamics_forward.1} parent=1 // pred_check_branch
      %335 = sbr.rel (0) target = $region21
    $region20: #{dynamics_forward.1} parent=1 // pred_region
      _
    $region21: #{dynamics_forward.1} parent=1 // pred_fallthru
      _
    // Predicated region
    $region22: #{dynamics_forward.1} parent=1 // pred_check
      _
    $region23: #{dynamics_forward.1} parent=1 // pred_check_branch
      %337 = sbr.rel (0) target = $region25
    $region24: #{dynamics_forward.1} parent=1 // pred_region
      _
    $region25: #{dynamics_forward.1} parent=1 // pred_fallthru
      _
    %338 = vsyncpa [#allocation4], 1

</llo_original>
